<compile_context>
chip_gen: v7x
topology: tpu7x:2x2x1
jax: 0.10.0
libtpu: 0.0.40
codegen_flags: <defaults>
</compile_context>

<pallas_src>
import functools

import jax
import jax.numpy as jnp
from jax.experimental import pallas as pl
from jax.experimental.pallas import tpu as pltpu


def _round_up(n, m):
    return ((n + m - 1) // m) * m


def _pick_tiles(BC, S, x_item, y_item, lanes_t=None):
    """Choose (ROWS_T, LANES_T, CHUNK)."""
    # Sublane packing: f32 -> 8, bf16 -> 16, int8/fp8 -> 32 rows per block.
    sub = max(8, 32 // int(x_item), 32 // int(y_item))
    ROWS_T = min(256, _round_up(BC, sub))

    lanes_all = _round_up(S, 128)
    if lanes_t is not None:
        assert lanes_t > 0 and lanes_t % 128 == 0, "lanes_t must be a multiple of 128"
        LANES_T = min(lanes_t, lanes_all)
    elif ROWS_T * lanes_all <= 64 * 1024 or lanes_all <= 512:
        LANES_T = lanes_all                      # whole spatial extent, one tile
    else:
        pair = x_item + y_item
        budget = (2 * 1024 * 1024) // (ROWS_T * pair)   # ~2 MiB HBM per pair/step
        cap = (128 * 1024) // ROWS_T                    # <=512 KiB f32 compute slab
        LANES_T = max(512, (min(budget, cap) // 512) * 512)
        LANES_T = min(LANES_T, _round_up(S, 512))

    # Strip width for the in-kernel chunk loop (bounds live temporaries to a few
    # vregs per row group); must divide LANES_T and be a multiple of 128.
    CHUNK = min(LANES_T, max(128, ((8 * 1024 // ROWS_T) // 128) * 128))
    while LANES_T % CHUNK:
        CHUNK -= 128
    return ROWS_T, LANES_T, CHUNK


def _dc_bce_kernel(x_ref, y_ref, out_ref, *, S, LANES_T, CHUNK, NSI,
                   has_tail, always_tail, tail_so, tail_si):
    """x_ref, y_ref: (ROWS_T, LANES_T) logit/target tiles (original dtypes).
    out_ref: (ROWS_T, 512) resident accumulator block:
      [:,   0:128] intersect = sum_sp sigmoid(x)*y   (lane-partial sums)
      [:, 128:256] sum_pred  = sum_sp sigmoid(x)
      [:, 256:384] sum_gt    = sum_sp y
      [:, 384:512] bce       = sum_sp BCEWithLogits(x, y)
    """
    so = pl.program_id(1)
    si = pl.program_id(2)
    rows = out_ref.shape[0]
    n_chunks = LANES_T // CHUNK
    n_sub = CHUNK // 128

    def fold128(v):
        # (rows, CHUNK) -> (rows, 128) via 128-aligned static-slice VPU adds.
        acc = v[:, 0:128]
        for k in range(1, n_sub):
            acc = acc + v[:, k * 128:(k + 1) * 128]
        return acc

    def chunk_terms(c, n_valid):
        # n_valid: None (all CHUNK lanes valid) or a static int for the single
        # chunk that straddles the spatial boundary of the tail tile.
        x = x_ref[:, c * CHUNK:(c + 1) * CHUNK].astype(jnp.float32)
        y = y_ref[:, c * CHUNK:(c + 1) * CHUNK].astype(jnp.float32)
        e = jnp.exp(-jnp.abs(x))                            # EUP, shared
        bce = jnp.maximum(x, 0.0) - x * y + jnp.log1p(e)    # stable BCE-with-logits
        inv = 1.0 / (1.0 + e)                               # exact recip (tolerance)
        p = jnp.where(x >= 0.0, inv, e * inv)               # sigmoid(x)
        if n_valid is not None:
            # Lanes >= S in the partial edge block hold undefined data.
            m = jax.lax.broadcasted_iota(jnp.int32, x.shape, 1) < n_valid
            zero = jnp.zeros_like(p)
            p = jnp.where(m, p, zero)
            y = jnp.where(m, y, zero)
            bce = jnp.where(m, bce, zero)
        return p * y, p, y, bce

    def run(tail):
        acc = [jnp.zeros((rows, 128), jnp.float32) for _ in range(4)]
        col0 = (tail_so * NSI + tail_si) * LANES_T          # static; tail tile base
        for c in range(n_chunks):
            n_valid = None
            if tail:
                start = col0 + c * CHUNK
                if start >= S:
                    break                                   # fully OOB chunk: skip
                if start + CHUNK > S:
                    n_valid = S - start                     # static boundary mask
            terms = chunk_terms(c, n_valid)
            acc = [a + fold128(t) for a, t in zip(acc, terms)]

        @pl.when(si == 0)                                   # first step: assign
        def _():
            for q in range(4):
                out_ref[:, q * 128:(q + 1) * 128] = acc[q]

        @pl.when(si != 0)                                   # later steps: accumulate
        def _():
            for q in range(4):
                out_ref[:, q * 128:(q + 1) * 128] += acc[q]

    if not has_tail:
        run(tail=False)
    elif always_tail:                                       # single (partial) tile
        run(tail=True)
    else:
        is_tail = jnp.logical_and(so == tail_so, si == tail_si)

        @pl.when(jnp.logical_not(is_tail))
        def _():
            run(tail=False)

        @pl.when(is_tail)
        def _():
            run(tail=True)


def dc_and_bce_loss(net_output, target, *, weight_ce=1.0, weight_dice=1.0,
                    smooth=1.0, lanes_t=None):
    """net_output, target: (B, C, H, W) (NCHW).  Inputs are streamed in their
    original dtype (bf16 halves HBM traffic) and cast to f32 in-kernel.
    Returns the scalar f32 loss.  `lanes_t` optionally overrides the spatial
    tile width (multiple of 128) for testing/tuning."""
    B, C, H, W = net_output.shape
    assert target.shape == net_output.shape
    BC, S = B * C, H * W

    x2 = net_output.reshape(BC, S)          # free reshapes (row-major collapse)
    y2 = target.reshape(BC, S)
    x_item = x2.dtype.itemsize
    y_item = y2.dtype.itemsize

    ROWS_T, LANES_T, CHUNK = _pick_tiles(BC, S, x_item, y_item, lanes_t)
    R_TILES = pl.cdiv(BC, ROWS_T)
    NS = pl.cdiv(S, LANES_T)

    # v7x has 2 TensorCores: when there is only one row tile, split the spatial
    # tiles into two "parallel" super-tiles (only when that leaves no fully-OOB
    # tile, i.e. NS even).  No-op cost on single-TC v5e/v6e.
    NSO = 2 if (R_TILES == 1 and NS >= 2 and NS % 2 == 0) else 1
    NSI = NS // NSO

    has_tail = (NS * LANES_T != S)
    always_tail = has_tail and (NS == 1)
    tail_so, tail_si = (NS - 1) // NSI, (NS - 1) % NSI

    kernel = functools.partial(
        _dc_bce_kernel, S=S, LANES_T=LANES_T, CHUNK=CHUNK, NSI=NSI,
        has_tail=has_tail, always_tail=always_tail,
        tail_so=tail_so, tail_si=tail_si)

    n = BC * S
    cost = pl.CostEstimate(
        flops=int(15 * n), transcendentals=int(3 * n),
        bytes_accessed=int(x2.size * x_item + y2.size * y_item
                           + BC * NSO * 512 * 4))

    vmem_need = (2 * ROWS_T * LANES_T * (x_item + y_item)   # double-buffered inputs
                 + 2 * ROWS_T * 512 * 4                     # output block
                 + 8 * ROWS_T * CHUNK * 4)                   # chunk temporaries
    vmem_limit = int(min(32 * 2**20, max(16 * 2**20, 2 * vmem_need)))

    partials = pl.pallas_call(
        kernel,
        out_shape=jax.ShapeDtypeStruct((BC, NSO * 512), jnp.float32),
        grid=(R_TILES, NSO, NSI),
        in_specs=[
            pl.BlockSpec((ROWS_T, LANES_T), lambda r, so, si: (r, so * NSI + si)),
            pl.BlockSpec((ROWS_T, LANES_T), lambda r, so, si: (r, so * NSI + si)),
        ],
        out_specs=pl.BlockSpec((ROWS_T, 512), lambda r, so, si: (r, so)),
        compiler_params=pltpu.CompilerParams(
            dimension_semantics=("parallel", "parallel", "arbitrary"),
            vmem_limit_bytes=vmem_limit),
        cost_estimate=cost,
    )(x2, y2)

    # ---- tiny O(BC * NSO * 512) final combine in plain JAX -------------------
    sums = partials.reshape(BC, NSO, 4, 128).sum(axis=(1, 3))   # (BC, 4)
    intersect, sum_pred, sum_gt = sums[:, 0], sums[:, 1], sums[:, 2]
    ce_loss = jnp.sum(sums[:, 3]) / float(BC * S)
    dc = (2.0 * intersect + smooth) / jnp.maximum(
        sum_gt + sum_pred + smooth, 1e-8)
    dc_loss = -jnp.mean(dc)
    return weight_ce * ce_loss + weight_dice * dc_loss


def _reference_loss(net_output, target, weight_ce=1.0, weight_dice=1.0,
                    smooth=1.0):
    # Pure-JAX reference for verification.
    x = net_output.astype(jnp.float32)
    y = target.astype(jnp.float32)
    bce = jnp.maximum(x, 0.0) - x * y + jnp.log1p(jnp.exp(-jnp.abs(x)))
    ce_loss = jnp.mean(bce)
    p = jax.nn.sigmoid(x)
    axes = (2, 3)
    intersect = jnp.sum(p * y, axis=axes)
    sum_pred = jnp.sum(p, axis=axes)
    sum_gt = jnp.sum(y, axis=axes)
    dc = (2.0 * intersect + smooth) / jnp.maximum(sum_gt + sum_pred + smooth,
                                                  1e-8)
    dc_loss = -jnp.mean(dc)
    return weight_ce * ce_loss + weight_dice * dc_loss


if __name__ == "__main__":
    key = jax.random.PRNGKey(0)

    cases = [
        # (B, C, H, W, logits dtype, lanes_t override)
        (2, 4, 16, 16, jnp.float32, None),    # exact lane tiling, single tile
        (2, 3, 10, 10, jnp.bfloat16, None),   # row + lane tails, bf16 stream
        (2, 3, 24, 24, jnp.float32, 128),     # multi-step reduction + tail, NSO=1
        (1, 4, 25, 40, jnp.float32, 128),     # even spatial tile count -> NSO=2 + tail
    ]
    for i, (B, C, H, W, dt, lt) in enumerate(cases):
        k1, k2 = jax.random.split(jax.random.fold_in(key, i))
        # Network logits (no nonlinearity applied, as the module requires).
        net_output = jax.random.normal(k1, (B, C, H, W),
                                       dtype=jnp.float32).astype(dt)
        # One-hot / region-style binary target.
        target = (jax.random.uniform(k2, (B, C, H, W)) < 0.5).astype(
            jnp.float32)

        loss = dc_and_bce_loss(net_output, target, weight_ce=1.0,
                               weight_dice=1.0, smooth=1.0, lanes_t=lt)
        loss = jax.block_until_ready(loss)

        ref = _reference_loss(net_output, target)
        assert jnp.allclose(loss, ref, rtol=1e-5, atol=1e-5), (i, loss, ref)

    print("KERNEL_OK")
</pallas_src>

<mosaic_0001>
module attributes {stable_mosaic.version = 11 : i64} {
  func.func @_dc_bce_kernel(%arg0: i32, %arg1: i32, %arg2: i32, %arg3: memref<8x256xf32, #tpu.memory_space<vmem>>, %arg4: memref<8x256xf32, #tpu.memory_space<vmem>>, %arg5: memref<8x512xf32, #tpu.memory_space<vmem>>) attributes {dimension_semantics = [#tpu.dimension_semantics<parallel>, #tpu.dimension_semantics<parallel>, #tpu.dimension_semantics<arbitrary>], iteration_bounds = array<i64: 1, 1, 1>, scalar_prefetch = 0 : i64, scratch_operands = 0 : i64, tpu.core_type = #tpu.core_type<tc>, window_params = [{transform_indices = @transform_0, window_bounds = array<i64: 8, 256>}, {transform_indices = @transform_1, window_bounds = array<i64: 8, 256>}, {transform_indices = @transform_2, window_bounds = array<i64: 8, 512>}]} {
    %cst = arith.constant 0.000000e+00 : f32
    %0 = vector.broadcast %cst : f32 to vector<8x128xf32>
    %cst_0 = arith.constant 0.000000e+00 : f32
    %1 = vector.broadcast %cst_0 : f32 to vector<8x128xf32>
    %cst_1 = arith.constant 0.000000e+00 : f32
    %2 = vector.broadcast %cst_1 : f32 to vector<8x128xf32>
    %cst_2 = arith.constant 0.000000e+00 : f32
    %3 = vector.broadcast %cst_2 : f32 to vector<8x128xf32>
    %c0 = arith.constant 0 : index
    %c0_3 = arith.constant 0 : index
    %4 = vector.load %arg3[%c0, %c0_3] : memref<8x256xf32, #tpu.memory_space<vmem>>, vector<8x256xf32>
    %c0_4 = arith.constant 0 : index
    %c0_5 = arith.constant 0 : index
    %5 = vector.load %arg4[%c0_4, %c0_5] : memref<8x256xf32, #tpu.memory_space<vmem>>, vector<8x256xf32>
    %6 = math.absf %4 : vector<8x256xf32>
    %cst_6 = arith.constant 0.000000e+00 : f32
    %7 = vector.broadcast %cst_6 : f32 to vector<8x256xf32>
    %8 = arith.subf %7, %6 : vector<8x256xf32>
    %9 = math.exp %8 : vector<8x256xf32>
    %cst_7 = arith.constant 0.000000e+00 : f32
    %10 = vector.broadcast %cst_7 : f32 to vector<8x256xf32>
    %11 = arith.maximumf %4, %10 : vector<8x256xf32>
    %12 = arith.mulf %4, %5 : vector<8x256xf32>
    %13 = arith.subf %11, %12 : vector<8x256xf32>
    %14 = math.log1p %9 : vector<8x256xf32>
    %15 = arith.addf %13, %14 : vector<8x256xf32>
    %cst_8 = arith.constant 1.000000e+00 : f32
    %16 = vector.broadcast %cst_8 : f32 to vector<8x256xf32>
    %17 = arith.addf %16, %9 : vector<8x256xf32>
    %cst_9 = arith.constant 1.000000e+00 : f32
    %18 = vector.broadcast %cst_9 : f32 to vector<8x256xf32>
    %19 = arith.divf %18, %17 : vector<8x256xf32>
    %cst_10 = arith.constant 0.000000e+00 : f32
    %20 = vector.broadcast %cst_10 : f32 to vector<8x256xf32>
    %21 = arith.cmpf oge, %4, %20 : vector<8x256xf32>
    %22 = arith.mulf %9, %19 : vector<8x256xf32>
    %23 = arith.select %21, %19, %22 : vector<8x256xi1>, vector<8x256xf32>
    %24 = arith.mulf %23, %5 : vector<8x256xf32>
    %25 = vector.extract_strided_slice %24 {offsets = [0, 0], sizes = [8, 128], strides = [1, 1]} : vector<8x256xf32> to vector<8x128xf32>
    %26 = vector.extract_strided_slice %24 {offsets = [0, 128], sizes = [8, 128], strides = [1, 1]} : vector<8x256xf32> to vector<8x128xf32>
    %27 = arith.addf %25, %26 : vector<8x128xf32>
    %28 = arith.addf %0, %27 : vector<8x128xf32>
    %29 = vector.extract_strided_slice %23 {offsets = [0, 0], sizes = [8, 128], strides = [1, 1]} : vector<8x256xf32> to vector<8x128xf32>
    %30 = vector.extract_strided_slice %23 {offsets = [0, 128], sizes = [8, 128], strides = [1, 1]} : vector<8x256xf32> to vector<8x128xf32>
    %31 = arith.addf %29, %30 : vector<8x128xf32>
    %32 = arith.addf %1, %31 : vector<8x128xf32>
    %33 = vector.extract_strided_slice %5 {offsets = [0, 0], sizes = [8, 128], strides = [1, 1]} : vector<8x256xf32> to vector<8x128xf32>
    %34 = vector.extract_strided_slice %5 {offsets = [0, 128], sizes = [8, 128], strides = [1, 1]} : vector<8x256xf32> to vector<8x128xf32>
    %35 = arith.addf %33, %34 : vector<8x128xf32>
    %36 = arith.addf %2, %35 : vector<8x128xf32>
    %37 = vector.extract_strided_slice %15 {offsets = [0, 0], sizes = [8, 128], strides = [1, 1]} : vector<8x256xf32> to vector<8x128xf32>
    %38 = vector.extract_strided_slice %15 {offsets = [0, 128], sizes = [8, 128], strides = [1, 1]} : vector<8x256xf32> to vector<8x128xf32>
    %39 = arith.addf %37, %38 : vector<8x128xf32>
    %40 = arith.addf %3, %39 : vector<8x128xf32>
    %c0_i32 = arith.constant 0 : i32
    %41 = arith.cmpi eq, %arg2, %c0_i32 : i32
    %42 = arith.extui %41 : i1 to i32
    %c0_i32_11 = arith.constant 0 : i32
    %43 = arith.cmpi ne, %42, %c0_i32_11 : i32
    scf.if %43 {
      %c0_14 = arith.constant 0 : index
      %c0_15 = arith.constant 0 : index
      %47 = vector.load %arg5[%c0_14, %c0_15] : memref<8x512xf32, #tpu.memory_space<vmem>>, vector<8x128xf32>
      tpu.vector_store %arg5[%c0_14, %c0_15], %28 {strides = array<i32>} : memref<8x512xf32, #tpu.memory_space<vmem>>, vector<8x128xf32>,
      %c0_16 = arith.constant 0 : index
      %c128 = arith.constant 128 : index
      %48 = vector.load %arg5[%c0_16, %c128] : memref<8x512xf32, #tpu.memory_space<vmem>>, vector<8x128xf32>
      tpu.vector_store %arg5[%c0_16, %c128], %32 {strides = array<i32>} : memref<8x512xf32, #tpu.memory_space<vmem>>, vector<8x128xf32>,
      %c0_17 = arith.constant 0 : index
      %c256 = arith.constant 256 : index
      %49 = vector.load %arg5[%c0_17, %c256] : memref<8x512xf32, #tpu.memory_space<vmem>>, vector<8x128xf32>
      tpu.vector_store %arg5[%c0_17, %c256], %36 {strides = array<i32>} : memref<8x512xf32, #tpu.memory_space<vmem>>, vector<8x128xf32>,
      %c0_18 = arith.constant 0 : index
      %c384 = arith.constant 384 : index
      %50 = vector.load %arg5[%c0_18, %c384] : memref<8x512xf32, #tpu.memory_space<vmem>>, vector<8x128xf32>
      tpu.vector_store %arg5[%c0_18, %c384], %40 {strides = array<i32>} : memref<8x512xf32, #tpu.memory_space<vmem>>, vector<8x128xf32>,
    } else {
    }
    %c0_i32_12 = arith.constant 0 : i32
    %44 = arith.cmpi ne, %arg2, %c0_i32_12 : i32
    %45 = arith.extui %44 : i1 to i32
    %c0_i32_13 = arith.constant 0 : i32
    %46 = arith.cmpi ne, %45, %c0_i32_13 : i32
    scf.if %46 {
      %c0_14 = arith.constant 0 : index
      %c0_15 = arith.constant 0 : index
      %47 = vector.load %arg5[%c0_14, %c0_15] : memref<8x512xf32, #tpu.memory_space<vmem>>, vector<8x128xf32>
      %48 = arith.addf %47, %28 : vector<8x128xf32>
      %c0_16 = arith.constant 0 : index
      %c0_17 = arith.constant 0 : index
      %49 = vector.load %arg5[%c0_16, %c0_17] : memref<8x512xf32, #tpu.memory_space<vmem>>, vector<8x128xf32>
      tpu.vector_store %arg5[%c0_16, %c0_17], %48 {strides = array<i32>} : memref<8x512xf32, #tpu.memory_space<vmem>>, vector<8x128xf32>,
      %c0_18 = arith.constant 0 : index
      %c128 = arith.constant 128 : index
      %50 = vector.load %arg5[%c0_18, %c128] : memref<8x512xf32, #tpu.memory_space<vmem>>, vector<8x128xf32>
      %51 = arith.addf %50, %32 : vector<8x128xf32>
      %c0_19 = arith.constant 0 : index
      %c128_20 = arith.constant 128 : index
      %52 = vector.load %arg5[%c0_19, %c128_20] : memref<8x512xf32, #tpu.memory_space<vmem>>, vector<8x128xf32>
      tpu.vector_store %arg5[%c0_19, %c128_20], %51 {strides = array<i32>} : memref<8x512xf32, #tpu.memory_space<vmem>>, vector<8x128xf32>,
      %c0_21 = arith.constant 0 : index
      %c256 = arith.constant 256 : index
      %53 = vector.load %arg5[%c0_21, %c256] : memref<8x512xf32, #tpu.memory_space<vmem>>, vector<8x128xf32>
      %54 = arith.addf %53, %36 : vector<8x128xf32>
      %c0_22 = arith.constant 0 : index
      %c256_23 = arith.constant 256 : index
      %55 = vector.load %arg5[%c0_22, %c256_23] : memref<8x512xf32, #tpu.memory_space<vmem>>, vector<8x128xf32>
      tpu.vector_store %arg5[%c0_22, %c256_23], %54 {strides = array<i32>} : memref<8x512xf32, #tpu.memory_space<vmem>>, vector<8x128xf32>,
      %c0_24 = arith.constant 0 : index
      %c384 = arith.constant 384 : index
      %56 = vector.load %arg5[%c0_24, %c384] : memref<8x512xf32, #tpu.memory_space<vmem>>, vector<8x128xf32>
      %57 = arith.addf %56, %40 : vector<8x128xf32>
      %c0_25 = arith.constant 0 : index
      %c384_26 = arith.constant 384 : index
      %58 = vector.load %arg5[%c0_25, %c384_26] : memref<8x512xf32, #tpu.memory_space<vmem>>, vector<8x128xf32>
      tpu.vector_store %arg5[%c0_25, %c384_26], %57 {strides = array<i32>} : memref<8x512xf32, #tpu.memory_space<vmem>>, vector<8x128xf32>,
    } else {
    }
    return
  }
  func.func @transform_0(%arg0: i32, %arg1: i32, %arg2: i32) -> (i32, i32) {
    %c1_i32 = arith.constant 1 : i32
    %0 = arith.muli %arg1, %c1_i32 : i32
    %1 = arith.addi %0, %arg2 : i32
    %c0_i32 = arith.constant 0 : i32
    return %arg0, %1 : i32, i32
  }
  func.func @transform_1(%arg0: i32, %arg1: i32, %arg2: i32) -> (i32, i32) {
    %c1_i32 = arith.constant 1 : i32
    %0 = arith.muli %arg1, %c1_i32 : i32
    %1 = arith.addi %0, %arg2 : i32
    %c0_i32 = arith.constant 0 : i32
    return %arg0, %1 : i32, i32
  }
  func.func @transform_2(%arg0: i32, %arg1: i32, %arg2: i32) -> (i32, i32) {
    %c0_i32 = arith.constant 0 : i32
    return %arg0, %arg1 : i32, i32
  }
}

</mosaic_0001>

<llo_original>
// kernel: tpu_custom_call.1
$region0: #{tpu_custom_call.1}
  #allocation0 [shape = 'u32[]', space=smem, size = 0x4, offset = 0x4, fixed_abs, tag = 'smem constant byte address 0x4 - core index']
  #allocation1 [shape = 'u32[144,128]{1,0:T(1,128)}', space=vmem, size = 0x12000, scoped, tag = 'internal scratch']
  %s0 = inlined_call_operand.hbm [shape: f32[8,256], index: 0, kind: input, shape index: {}]
  %s1 = inlined_call_operand.hbm [shape: f32[8,256], index: 1, kind: input, shape index: {}]
  %s2 = inlined_call_operand.hbm [shape: f32[8,512], index: 2, kind: output, shape index: {}]
  %s3 = sld [smem:[#allocation0]]
  $region34: #{tpu_custom_call.1} parent=0
    _
  %s5 = ssub.s32 1, %s3
  %s6 = scalar_select 0, %s5, %s3
  $region1: #{tpu_custom_call.1} parent=0
    #allocation2 [shape = 'u8[8192]{0}', space=vmem, size = 0x2000, scoped, tag = 'input window, operand 0, single buffered']
    #allocation3 [shape = 's32[1]{0}', space=sflag, size = 0x4, scoped, tag = 'scoped memory for tpu_custom_call.1']
    #allocation4 [shape = 's32[1]{0}', space=sflag, size = 0x4, scoped, tag = 'scoped memory for tpu_custom_call.1']
    #allocation5 [shape = 'u8[8192]{0}', space=vmem, size = 0x2000, scoped, tag = 'input window, operand 1, single buffered']
    #allocation6 [shape = 's32[1]{0}', space=sflag, size = 0x4, scoped, tag = 'scoped memory for tpu_custom_call.1']
    #allocation7 [shape = 'u8[16384]{0}', space=vmem, size = 0x4000, scoped, tag = 'output window, operand 0, single buffered']
    %7 = vsyncpa [#allocation3], 0
    %8 = vsyncpa [#allocation6], 0
    %9 = vsyncpa [#allocation4], 0
    // Predicated region
    $region2: #{tpu_custom_call.1} parent=1 // pred_check
      _
    $region3: #{tpu_custom_call.1} parent=1 // pred_check_branch
      %11 = sbr.rel (0) target = $region5
    $region4: #{tpu_custom_call.1} parent=1 // pred_region
      %s12 = sadd.s32 0, 0
      %s13 = smul.u32 2, %s12
      %s15 = ssub.s32 256, 256
      %16 = vsyncadd [#allocation3], %s15
      %s17 = smul.addr %s13, 128
      %s18 = scalar_lea.hbm %s0, %s17
      %s20 = sshll.u32 [#allocation2], 4
      %s21 = int_to_ptr.vmem [resolvable:$true] %s20
      %23 = dma.hbm_to_vmem [thread:$0]  %s18, 256, %s21, [#allocation3]
    $region5: #{tpu_custom_call.1} parent=1 // pred_fallthru
      _
    // Predicated region
    $region6: #{tpu_custom_call.1} parent=1 // pred_check
      _
    $region7: #{tpu_custom_call.1} parent=1 // pred_check_branch
      %25 = sbr.rel (0) target = $region9
    $region8: #{tpu_custom_call.1} parent=1 // pred_region
      %s26 = sadd.s32 0, 0
      %s27 = smul.u32 2, %s26
      %s29 = ssub.s32 256, 256
      %30 = vsyncadd [#allocation6], %s29
      %s31 = smul.addr %s27, 128
      %s32 = scalar_lea.hbm %s1, %s31
      %s34 = sshll.u32 [#allocation5], 4
      %s35 = int_to_ptr.vmem [resolvable:$true] %s34
      %37 = dma.hbm_to_vmem [thread:$0]  %s32, 256, %s35, [#allocation6]
    $region9: #{tpu_custom_call.1} parent=1 // pred_fallthru
      _
    // Predicated region
    $region10: #{tpu_custom_call.1} parent=1 // pred_check
      _
    $region11: #{tpu_custom_call.1} parent=1 // pred_check_branch
      %39 = sbr.rel (0) target = $region13
    $region12: #{tpu_custom_call.1} parent=1 // pred_region
      %40 = dma.done [#allocation3], 256
    $region13: #{tpu_custom_call.1} parent=1 // pred_fallthru
      _
    // Predicated region
    $region14: #{tpu_custom_call.1} parent=1 // pred_check
      _
    $region15: #{tpu_custom_call.1} parent=1 // pred_check_branch
      %42 = sbr.rel (0) target = $region17
    $region16: #{tpu_custom_call.1} parent=1 // pred_region
      %43 = dma.done [#allocation6], 256
    $region17: #{tpu_custom_call.1} parent=1 // pred_fallthru
      _
    %s44 = sadd.s32 0, 0
    %s45 = smul.u32 2, %s44
    %s46 = sadd.s32 0, 0
    %s47 = smul.u32 2, %s46
    %v48 = vld [vmem:[#allocation2] sm:$0xff]
    %v49 = vld [vmem:[#allocation2 + $0x8] sm:$0xff]
    %v50 = vld [vmem:[#allocation5] sm:$0xff]
    %v51 = vld [vmem:[#allocation5 + $0x8] sm:$0xff]
    %v52 = vand.u32 2147483647, %v48
    %v53 = vand.u32 2147483647, %v49
    %v54 = vsub.f32 0.0, %v52
    %v55 = vsub.f32 0.0, %v53
    %v56 = vmul.f32 %v54, 1.442695
    %v57 = vpow.pop %v56
    %v58 = vmul.f32 %v55, 1.442695
    %v59 = vpow.pop %v58
    %v60 = vmax.f32 %v48, 0.0
    %v61 = vmax.f32 %v49, 0.0
    %v62 = vmul.f32 %v48, %v50
    %v63 = vmul.f32 %v49, %v51
    %v64 = vsub.f32 %v60, %v62
    %v65 = vsub.f32 %v61, %v63
    %v66 = vadd.f32 %v57, 1.0
    %v67 = vlog2.pop %v66
    %v68 = vmul.f32 %v67, 0.6931472
    %v69 = vmul.f32 -0.5, %v57
    %v70 = vadd.f32 %v69, 1.0
    %v71 = vmul.f32 %v70, %v57
    %v72 = vand.u32 2147483647, %v57
    %vm73 = vcmp.lt.f32.partialorder %v72, 0.0004427343
    %v74 = vsel %vm73, %v71, %v68
    %v75 = vadd.f32 %v59, 1.0
    %v76 = vlog2.pop %v75
    %v77 = vmul.f32 %v76, 0.6931472
    %v78 = vmul.f32 -0.5, %v59
    %v79 = vadd.f32 %v78, 1.0
    %v80 = vmul.f32 %v79, %v59
    %v81 = vand.u32 2147483647, %v59
    %vm82 = vcmp.lt.f32.partialorder %v81, 0.0004427343
    %v83 = vsel %vm82, %v80, %v77
    %v84 = vadd.f32 %v64, %v74
    %v85 = vadd.f32 %v65, %v83
    %v86 = vadd.f32 %v57, 1.0
    %v87 = vadd.f32 %v59, 1.0
    %v88 = vrcp.pop %v86
    %v89 = vmul.f32 1.0, %v88
    %v90 = vrcp.pop %v87
    %v91 = vmul.f32 1.0, %v90
    %vm92 = vcmp.ge.f32.partialorder %v48, 0.0
    %vm93 = vcmp.ge.f32.partialorder %v49, 0.0
    %v94 = vmul.f32 %v57, %v89
    %v95 = vmul.f32 %v59, %v91
    %v96 = vsel %vm92, %v89, %v94
    %v97 = vsel %vm93, %v91, %v95
    %v98 = vmul.f32 %v96, %v50
    %v99 = vmul.f32 %v97, %v51
    %v100 = vadd.f32 %v98, %v99
    %v101 = vadd.f32 %v100, 0.0
    %v102 = vadd.f32 %v96, %v97
    %v103 = vadd.f32 %v102, 0.0
    %v104 = vadd.f32 %v50, %v51
    %v105 = vadd.f32 %v104, 0.0
    %v106 = vadd.f32 %v84, %v85
    %v107 = vadd.f32 %v106, 0.0
    %p108 = scmp.eq.s32.totalorder 0, 0
    // Predicated region
    $region18: #{tpu_custom_call.1} parent=1 // pred_check
      %p109 = pneg %p108
    $region19: #{tpu_custom_call.1} parent=1 // pred_check_branch
      %111 = sbr.rel (%p109) target = $region21
    $region20: #{tpu_custom_call.1} parent=1 // pred_region
      %112 = vst [vmem:[#allocation7] sm:$0xff] %v101
      %113 = vst [vmem:[#allocation7 + $0x8] sm:$0xff] %v103
      %114 = vst [vmem:[#allocation7 + $0x10] sm:$0xff] %v105
      %115 = vst [vmem:[#allocation7 + $0x18] sm:$0xff] %v107
    $region21: #{tpu_custom_call.1} parent=1 // pred_fallthru
      _
    %p116 = scmp.ne.s32.totalorder 0, 0
    // Predicated region
    $region22: #{tpu_custom_call.1} parent=1 // pred_check
      %p117 = pneg %p116
    $region23: #{tpu_custom_call.1} parent=1 // pred_check_branch
      %119 = sbr.rel (%p117) target = $region25
    $region24: #{tpu_custom_call.1} parent=1 // pred_region
      %v120 = vld [vmem:[#allocation7] sm:$0xff]
      %v121 = vadd.f32 %v120, %v101
      %122 = vst [vmem:[#allocation7] sm:$0xff] %v121
      %v123 = vld [vmem:[#allocation7 + $0x8] sm:$0xff]
      %v124 = vadd.f32 %v123, %v103
      %125 = vst [vmem:[#allocation7 + $0x8] sm:$0xff] %v124
      %v126 = vld [vmem:[#allocation7 + $0x10] sm:$0xff]
      %v127 = vadd.f32 %v126, %v105
      %128 = vst [vmem:[#allocation7 + $0x10] sm:$0xff] %v127
      %v129 = vld [vmem:[#allocation7 + $0x18] sm:$0xff]
      %v130 = vadd.f32 %v129, %v107
      %131 = vst [vmem:[#allocation7 + $0x18] sm:$0xff] %v130
    $region25: #{tpu_custom_call.1} parent=1 // pred_fallthru
      _
    // Predicated region
    $region26: #{tpu_custom_call.1} parent=1 // pred_check
      _
    $region27: #{tpu_custom_call.1} parent=1 // pred_check_branch
      %133 = sbr.rel (0) target = $region29
    $region28: #{tpu_custom_call.1} parent=1 // pred_region
      %s135 = ssub.s32 512, 512
      %136 = vsyncadd [#allocation4], %s135
      %s138 = sshll.u32 [#allocation7], 4
      %s139 = int_to_ptr.vmem [resolvable:$true] %s138
      %141 = dma.vmem_to_hbm [thread:$0]  %s139, 512, %s2, [#allocation4]
    $region29: #{tpu_custom_call.1} parent=1 // pred_fallthru
      _
    // Predicated region
    $region30: #{tpu_custom_call.1} parent=1 // pred_check
      _
    $region31: #{tpu_custom_call.1} parent=1 // pred_check_branch
      %143 = sbr.rel (0) target = $region33
    $region32: #{tpu_custom_call.1} parent=1 // pred_region
      %144 = dma.done [#allocation4], 512
    $region33: #{tpu_custom_call.1} parent=1 // pred_fallthru
      _
    %145 = vsyncpa [#allocation3], 1
    %146 = vsyncpa [#allocation6], 1
    %147 = vsyncpa [#allocation4], 1

</llo_original>
